<compile_context>
chip_gen: v7x
topology: tpu7x:2x2x1
jax: 0.10.0
libtpu: 0.0.40
codegen_flags: <defaults>
</compile_context>

<pallas_src>
import math

import jax
import jax.numpy as jnp
from jax.experimental import pallas as pl
from jax.experimental.pallas import tpu as pltpu


def _dma_copy_kernel(x_hbm, o_hbm, sem):
    # Single full-array HBM->HBM DMA; the only unavoidable cost of a copying
    # "view" (read N bytes + write N bytes at HBM roofline).
    cp = pltpu.make_async_copy(x_hbm, o_hbm, sem)
    cp.start()
    cp.wait()


def _resolve_shape(x, shape):
    """torch.view-style shape resolution (single -1 allowed)."""
    batch = x.shape[0]
    n_elems = math.prod(x.shape[1:]) if x.ndim > 1 else 1
    shape = tuple(int(s) for s in shape)
    if shape.count(-1) > 1:
        raise ValueError("only one -1 allowed in view shape")
    if -1 in shape:
        known = math.prod(s for s in shape if s != -1)
        if known == 0 or n_elems % known != 0:
            raise ValueError(f"cannot view {x.shape} as (batch, {shape})")
        shape = tuple(n_elems // known if s == -1 else s for s in shape)
    if math.prod(shape) != n_elems:
        raise ValueError(f"cannot view {x.shape} as (batch, {shape})")
    return batch, n_elems, shape


def view_pallas(x, shape, *, copy=True):
    """Replicates torch.Tensor.view((batch, *shape)) semantics.

    copy=False returns the metadata-only reshape (the faithful torch.view:
    zero HBM traffic).  copy=True (default, since the exercise mandates a
    kernel) additionally materializes the result via one HBM->HBM DMA.
    """
    batch, _, shape = _resolve_shape(x, shape)
    out_shape = (batch, *shape)

    # Metadata-only reshape (row-major contiguous, free).
    x_view = jnp.reshape(x, out_shape)
    if not copy:
        return x_view

    return pl.pallas_call(
        _dma_copy_kernel,
        out_shape=jax.ShapeDtypeStruct(out_shape, x.dtype),
        in_specs=[pl.BlockSpec(memory_space=pl.ANY)],
        out_specs=pl.BlockSpec(memory_space=pl.ANY),
        scratch_shapes=[pltpu.SemaphoreType.DMA],
    )(x_view)


class ViewPallas:
    """Mirror of the PyTorch View module."""

    def __init__(self, shape):
        self.shape = tuple(shape)

    def __repr__(self):
        return f"View{self.shape}"

    def __call__(self, x):
        return view_pallas(x, self.shape)


if __name__ == "__main__":
    key = jax.random.PRNGKey(0)

    # backbone_vae usage: flatten conv features.
    # x: (batch=2, channels=4, H=16, W=16)  ->  View((-1,)) -> (2, 1024)
    x = jax.random.normal(key, (2, 4, 16, 16), dtype=jnp.float32)
    view_flatten = ViewPallas((-1,))
    y = view_flatten(x)
    jax.block_until_ready(y)
    assert y.shape == (2, 4 * 16 * 16)
    assert jnp.array_equal(y, x.reshape(2, -1))

    # Inverse direction: (2, 1024) -> View((4, 16, 16)) -> (2, 4, 16, 16)
    view_unflatten = ViewPallas((4, 16, 16))
    z = view_unflatten(y)
    jax.block_until_ready(z)
    assert z.shape == (2, 4, 16, 16)
    assert jnp.array_equal(z, x)

    # Odd total element count (not a multiple of 128) — DMA path is layout
    # agnostic, no special-case fallback needed.
    w = jax.random.normal(key, (2, 5, 3), dtype=jnp.float32)
    v = ViewPallas((15,))(w)
    jax.block_until_ready(v)
    assert v.shape == (2, 15)
    assert jnp.array_equal(v, w.reshape(2, 15))

    # Sub-32-bit dtype — also layout agnostic for a pure DMA.
    xb = jax.random.normal(key, (2, 4, 16, 16), dtype=jnp.bfloat16)
    yb = ViewPallas((-1,))(xb)
    jax.block_until_ready(yb)
    assert yb.shape == (2, 1024)
    assert jnp.array_equal(yb, xb.reshape(2, -1))

    # Metadata-only short-circuit (the faithful torch.view).
    y0 = view_pallas(x, (-1,), copy=False)
    jax.block_until_ready(y0)
    assert jnp.array_equal(y0, x.reshape(2, -1))

    print("KERNEL_OK")
</pallas_src>

<mosaic_0001>
module attributes {stable_mosaic.version = 11 : i64} {
  func.func @_dma_copy_kernel(%arg0: memref<2x1024xf32, #tpu.memory_space<any>>, %arg1: memref<2x1024xf32, #tpu.memory_space<any>>, %arg2: memref<!tpu.dma_semaphore, #tpu.memory_space<semaphore_mem>>) attributes {dimension_semantics = [], scalar_prefetch = 0 : i64, scratch_operands = 1 : i64, tpu.core_type = #tpu.core_type<tc>} {
    tpu.enqueue_dma source(%arg0 : memref<2x1024xf32, #tpu.memory_space<any>>) target(%arg1 : memref<2x1024xf32, #tpu.memory_space<any>>) target_semaphore(%arg2 : memref<!tpu.dma_semaphore, #tpu.memory_space<semaphore_mem>>)
    tpu.wait_dma2 semaphore(%arg2 : memref<!tpu.dma_semaphore, #tpu.memory_space<semaphore_mem>>) src(%arg0 : memref<2x1024xf32, #tpu.memory_space<any>>) dst(%arg1 : memref<2x1024xf32, #tpu.memory_space<any>>)
    return
  }
}

</mosaic_0001>

<llo_original>
// kernel: tpu_custom_call.1
$region0: #{tpu_custom_call.1}
  #allocation0 [shape = 'u32[]', space=smem, size = 0x4, offset = 0x4, fixed_abs, tag = 'smem constant byte address 0x4 - core index']
  #allocation1 [shape = 'u32[144,128]{1,0:T(1,128)}', space=vmem, size = 0x12000, scoped, tag = 'internal scratch']
  #allocation2 [shape = 's32[1]{0}', space=sflag, size = 0x4, scoped, tag = 'scratch operand']
  #allocation3 [shape = 's32[]', space=sflag, size = 0x4, offset = 0, fixed_abs, tag = 'sflag constant byte address 0x0 - dummy sync flag']
  #allocation4 [shape = 'u32[0]{0}', space=smem, size = 0, offset = 0, fixed_abs, tag = 'smem constant byte address 0x0 - null']
  %s0 = inlined_call_operand.hbm [shape: f32[2,1024], index: 0, kind: input, shape index: {}]
  %s1 = inlined_call_operand.hbm [shape: f32[2,1024], index: 1, kind: output, shape index: {}]
  %s2 = sld [smem:[#allocation0]]
  $region2: #{tpu_custom_call.1} parent=0
    _
  %s4 = ssub.s32 1, %s2
  %s5 = scalar_select 0, %s4, %s2
  %s7 = sshll.u32 1, 14
  %s8 = sxor.u32 4294967295, %s7
  %s11 = sshll.u32 3, 24
  %s12 = sxor.u32 4294967295, %s11
  %s13 = sand.u32 0, %s12
  %s15 = sor.u32 %s13, 0
  %18 = dma.general %s0, 256, %s1, [#allocation2], [#allocation3], [#allocation4], %s15, 0
  %s19 = smul.u32 2, 1
  %s20 = smul.u32 %s19, 8
  %s21 = sshll.u32 %s20, 4
  %22 = dma.done [#allocation2], %s21
  %23 = vsyncmov [#allocation2]
  %s24 = vpop.sfrf %23
  %p25 = scmp.eq.s32.totalorder %s24, 0
  %p26 = pneg %p25
  %28 = shalt.err (%p26)

</llo_original>
